<compile_context>
chip_gen: v5e
topology: v5e:2x2
jax: 0.10.0
libtpu: 0.0.40
codegen_flags: <defaults>
</compile_context>

<pallas_src>
import functools

import jax
import jax.numpy as jnp
from jax.experimental import pallas as pl
from jax.experimental.pallas import tpu as pltpu

VMEM_LIMIT_BYTES = 32 * 1024 * 1024


# ----------------------------------------------------------------------------
# small helpers
# ----------------------------------------------------------------------------
def _round_up(x, m):
    return ((x + m - 1) // m) * m


def _pad_to(x, target, axis, value=0.0):
    pad = target - x.shape[axis]
    if pad == 0:
        return x
    pads = [(0, 0)] * x.ndim
    pads[axis] = (0, pad)
    return jnp.pad(x, pads, constant_values=value)


def _pick_tile(dim, t_max):
    """Largest multiple of 128 <= t_max that divides round_up(dim, 128)."""
    d128 = _round_up(dim, 128)
    best, t = 128, 128
    while t <= min(t_max, d128):
        if d128 % t == 0:
            best = t
        t += 128
    return best


# ----------------------------------------------------------------------------
# Pallas GEMM kernel: out = act(x @ w + b), accumulated over the K grid axis.
#   x, w in bf16 -> MXU; f32 accumulator; bias/ReLU epilogue in f32;
#   output cast to o_ref.dtype (bf16 for hidden layers, f32 for logits).
#   x_resident=True: the activation block spans the full K dim (stays in
#   VMEM across the k loop); only the weight streams over the reduction.
# ----------------------------------------------------------------------------
def _gemm_kernel(x_ref, w_ref, b_ref, o_ref, acc_ref, *, relu, x_resident, tk):
    k = pl.program_id(2)

    @pl.when(k == 0)
    def _init():
        acc_ref[...] = jnp.zeros_like(acc_ref)

    if x_resident:
        start = pl.multiple_of(k * tk, tk)
        x = x_ref[:, pl.ds(start, tk)]
    else:
        x = x_ref[...]
    acc_ref[...] += jnp.dot(x, w_ref[...], preferred_element_type=jnp.float32)

    @pl.when(k == pl.num_programs(2) - 1)
    def _finalize():
        out = acc_ref[...] + b_ref[...]            # f32 epilogue
        if relu:
            out = jnp.maximum(out, 0.0)
        o_ref[...] = out.astype(o_ref.dtype)


def matmul_bias_act(x, layer, *, relu, out_dtype=jnp.bfloat16,
                    tm_max=128, x_resident=False, keep_n_pad=False):
    """x: (M, K) (bf16 preferred).  layer: pre-padded bf16 weight (Kp, Np),
    f32 bias, tile sizes.  Returns (M, N) or (M, Np) if keep_n_pad."""
    wp, bp = layer["w"], layer["b"]
    Kp, Np = wp.shape
    tk, tn = layer["tk"], layer["tn"]

    M, K = x.shape
    tm = min(tm_max, _round_up(M, 8))
    Mp = _round_up(M, tm)

    if x.dtype != jnp.bfloat16:
        x = x.astype(jnp.bfloat16)
    xp = _pad_to(_pad_to(x, Mp, 0), Kp, 1)

    grid = (Mp // tm, Np // tn, Kp // tk)

    if x_resident:
        x_spec = pl.BlockSpec((tm, Kp), lambda i, j, k: (i, 0))
    else:
        x_spec = pl.BlockSpec((tm, tk), lambda i, j, k: (i, k))

    kernel = functools.partial(_gemm_kernel, relu=relu,
                               x_resident=x_resident, tk=tk)
    out = pl.pallas_call(
        kernel,
        out_shape=jax.ShapeDtypeStruct((Mp, Np), out_dtype),
        grid_spec=pltpu.PrefetchScalarGridSpec(
            num_scalar_prefetch=0,
            grid=grid,
            in_specs=[
                x_spec,
                pl.BlockSpec((tk, tn), lambda i, j, k: (k, j)),
                pl.BlockSpec((1, tn), lambda i, j, k: (0, j)),
            ],
            out_specs=pl.BlockSpec((tm, tn), lambda i, j, k: (i, j)),
            scratch_shapes=[pltpu.VMEM((tm, tn), jnp.float32)],
        ),
        compiler_params=pltpu.CompilerParams(
            dimension_semantics=("parallel", "parallel", "arbitrary"),
            vmem_limit_bytes=VMEM_LIMIT_BYTES),
    )(xp, wp, bp)

    if Mp != M:
        out = out[:M]
    if keep_n_pad:
        return out
    return out[:, :layer["N"]]


# ----------------------------------------------------------------------------
# Pallas max-pool: separable 3x1 / 1x3 element-wise max (bf16 throughout).
# ----------------------------------------------------------------------------
def _max3_kernel(a_ref, b_ref, c_ref, o_ref):
    o_ref[...] = jnp.maximum(jnp.maximum(a_ref[...], b_ref[...]), c_ref[...])


def _max3(slices, tm_max=512):
    """Element-wise max of three equally shaped (M, C) arrays (C lane-dense)."""
    M, C = slices[0].shape
    tm = min(tm_max, _round_up(M, 8))
    Mp = _round_up(M, tm)
    padded = [_pad_to(s, Mp, 0) for s in slices]   # pad rows sliced off below

    out = pl.pallas_call(
        _max3_kernel,
        out_shape=jax.ShapeDtypeStruct((Mp, C), slices[0].dtype),
        grid_spec=pltpu.PrefetchScalarGridSpec(
            num_scalar_prefetch=0,
            grid=(Mp // tm,),
            in_specs=[pl.BlockSpec((tm, C), lambda i: (i, 0))] * 3,
            out_specs=pl.BlockSpec((tm, C), lambda i: (i, 0)),
        ),
        compiler_params=pltpu.CompilerParams(
            dimension_semantics=("parallel",),
            vmem_limit_bytes=VMEM_LIMIT_BYTES),
    )(*padded)
    return out[:M] if Mp != M else out


def maxpool2d(x, k=3, s=2):
    """x: NHWC -> NHWC max pooled (kernel=k=3, stride=s, no padding)."""
    assert k == 3
    N, H, W, C = x.shape
    Ho = (H - k) // s + 1
    Wo = (W - k) // s + 1

    # vertical 3x1 pool (stride s along H)
    vsl = [x[:, dy:dy + s * (Ho - 1) + 1:s, :, :].reshape(N * Ho * W, C)
           for dy in range(k)]
    v = _max3(vsl).reshape(N, Ho, W, C)

    # horizontal 1x3 pool (stride s along W)
    hsl = [v[:, :, dx:dx + s * (Wo - 1) + 1:s, :].reshape(N * Ho * Wo, C)
           for dx in range(k)]
    return _max3(hsl).reshape(N, Ho, Wo, C)


# ----------------------------------------------------------------------------
# Conv2d (+ ReLU) via im2col + Pallas GEMM (bf16 patches, padded Cout kept).
# ----------------------------------------------------------------------------
def _extract_patches(x, kh, kw, stride, pad):
    N, H, W, C = x.shape
    xp = jnp.pad(x, ((0, 0), (pad, pad), (pad, pad), (0, 0)))
    Hp, Wp = H + 2 * pad, W + 2 * pad
    Ho = (Hp - kh) // stride + 1
    Wo = (Wp - kw) // stride + 1
    cols = []
    for dy in range(kh):
        for dx in range(kw):
            cols.append(xp[:, dy:dy + stride * (Ho - 1) + 1:stride,
                           dx:dx + stride * (Wo - 1) + 1:stride, :])
    patches = jnp.stack(cols, axis=3)            # (N, Ho, Wo, kh*kw, C)
    return patches.reshape(N, Ho, Wo, kh * kw * C), Ho, Wo


def conv2d_relu(x, layer):
    """x: NHWC bf16 (channels may carry lane padding matching the layer's
    pre-padded Cin rows).  Output keeps the lane-padded Cout."""
    kh, kw, stride, pad = layer["kh"], layer["kw"], layer["stride"], layer["pad"]
    patches, Ho, Wo = _extract_patches(x, kh, kw, stride, pad)
    N = x.shape[0]
    xm = patches.reshape(N * Ho * Wo, patches.shape[-1])
    out = matmul_bias_act(xm, layer, relu=True, out_dtype=jnp.bfloat16,
                          tm_max=128, x_resident=False, keep_n_pad=True)
    return out.reshape(N, Ho, Wo, layer["Np"])


# ----------------------------------------------------------------------------
# AdaptiveAvgPool2d((6,6))  (tiny reduction -> plain JAX glue, f32 math)
# ----------------------------------------------------------------------------
def adaptive_avg_pool(x, out_hw=(6, 6)):
    N, H, W, C = x.shape
    OH, OW = out_hw
    xf = x.astype(jnp.float32)
    rows = []
    for i in range(OH):
        h0 = (i * H) // OH
        h1 = -(-((i + 1) * H) // OH)
        cols = []
        for j in range(OW):
            w0 = (j * W) // OW
            w1 = -(-((j + 1) * W) // OW)
            cols.append(jnp.mean(xf[:, h0:h1, w0:w1, :], axis=(1, 2)))
        rows.append(jnp.stack(cols, axis=1))
    return jnp.stack(rows, axis=1).astype(x.dtype)   # (N, OH, OW, C) bf16


# ----------------------------------------------------------------------------
# Parameter preparation: transpose / pad / cast ONCE at init.
# ----------------------------------------------------------------------------
def _prep_gemm_layer(wm, b, *, tk_max, tn_max, extra=None):
    """wm: (K, N) f32, b: (N,) f32 -> padded bf16 weight + f32 bias + tiling."""
    K, N = wm.shape
    tk = _pick_tile(K, tk_max)
    tn = _pick_tile(N, tn_max)
    Kp = _round_up(K, tk)
    Np = _round_up(N, tn)
    wp = _pad_to(_pad_to(wm, Kp, 0), Np, 1).astype(jnp.bfloat16)
    bp = _pad_to(b.reshape(1, -1).astype(jnp.float32), Np, 1)
    layer = {"w": wp, "b": bp, "N": N, "Np": Np, "K": K, "Kp": Kp,
             "tk": tk, "tn": tn}
    if extra:
        layer.update(extra)
    return layer


def _prep_conv_layer(w, b, *, stride, pad, cin_pad=None,
                     tk_max=1536, tn_max=512):
    """w: PyTorch layout (Cout, Cin, kh, kw) -> (kh*kw*Cin_pad, Cout) GEMM
    weight.  cin_pad: carried lane padding of the incoming activation; the
    extra Cin rows are zero so padded input channels contribute nothing."""
    Cout, Cin, kh, kw = w.shape
    wt = jnp.transpose(w, (2, 3, 1, 0))            # (kh, kw, Cin, Cout)
    if cin_pad is not None and cin_pad > Cin:
        wt = _pad_to(wt, cin_pad, axis=2)
        Cin = cin_pad
    wm = wt.reshape(kh * kw * Cin, Cout)
    return _prep_gemm_layer(wm, b, tk_max=tk_max, tn_max=tn_max,
                            extra={"kh": kh, "kw": kw,
                                   "stride": stride, "pad": pad})


def _prep_fc_layer(w, b, *, nhwc_reorder=None, tk_max=1024, tn_max=2048):
    """w: PyTorch layout (fout, fin).  Optionally permute the fin axis from
    NCHW-flatten order (c,h,w) to NHWC-flatten order (h,w,c)."""
    if nhwc_reorder is not None:
        C, H, W = nhwc_reorder
        w = jnp.transpose(w.reshape(w.shape[0], C, H, W), (0, 2, 3, 1))
        w = w.reshape(w.shape[0], H * W * C)
    return _prep_gemm_layer(jnp.transpose(w), b, tk_max=tk_max, tn_max=tn_max)


def init_params(key, num_classes=6):
    def conv_init(k, cout, cin, kh, kw):
        k1, k2 = jax.random.split(k)
        std = (2.0 / (cin * kh * kw)) ** 0.5
        return (jax.random.normal(k1, (cout, cin, kh, kw), jnp.float32) * std,
                jax.random.normal(k2, (cout,), jnp.float32) * 0.01)

    def fc_init(k, fout, fin):
        k1, k2 = jax.random.split(k)
        std = (2.0 / fin) ** 0.5
        return (jax.random.normal(k1, (fout, fin), jnp.float32) * std,
                jax.random.normal(k2, (fout,), jnp.float32) * 0.01)

    keys = jax.random.split(key, 8)
    c1 = conv_init(keys[0], 64, 1, 11, 11)
    c2 = conv_init(keys[1], 192, 64, 5, 5)
    c3 = conv_init(keys[2], 384, 192, 3, 3)
    c4 = conv_init(keys[3], 256, 384, 3, 3)
    c5 = conv_init(keys[4], 256, 256, 3, 3)
    f1 = fc_init(keys[5], 4096, 256 * 6 * 6)
    f2 = fc_init(keys[6], 4096, 4096)
    f3 = fc_init(keys[7], num_classes, 4096)

    conv1 = _prep_conv_layer(*c1, stride=4, pad=2)                      # Np=128
    conv2 = _prep_conv_layer(*c2, stride=1, pad=2, cin_pad=conv1["Np"])  # Np=256
    conv3 = _prep_conv_layer(*c3, stride=1, pad=1, cin_pad=conv2["Np"])  # Np=384
    conv4 = _prep_conv_layer(*c4, stride=1, pad=1, cin_pad=conv3["Np"])  # Np=256
    conv5 = _prep_conv_layer(*c5, stride=1, pad=1, cin_pad=conv4["Np"])  # Np=256

    return {
        "conv1": conv1, "conv2": conv2, "conv3": conv3,
        "conv4": conv4, "conv5": conv5,
        # fc1 rows permuted once so the NHWC flatten feeds it directly
        # (equivalent to torch.flatten on NCHW followed by the original fc1).
        "fc1": _prep_fc_layer(*f1, nhwc_reorder=(256, 6, 6)),
        "fc2": _prep_fc_layer(*f2),
        "fc3": _prep_fc_layer(*f3),
    }


# ----------------------------------------------------------------------------
# Forward pass (mirrors AlexNet.forward, inference mode; Dropout = identity)
# ----------------------------------------------------------------------------
def alexnet_forward(x_nchw, params):
    x = jnp.transpose(x_nchw, (0, 2, 3, 1)).astype(jnp.bfloat16)  # NCHW->NHWC

    x = conv2d_relu(x, params["conv1"])     # (N, H, W, 128) bf16 (64 + pad)
    x = maxpool2d(x, 3, 2)
    x = conv2d_relu(x, params["conv2"])     # (N, H, W, 256) bf16 (192 + pad)
    x = maxpool2d(x, 3, 2)
    x = conv2d_relu(x, params["conv3"])     # 384
    x = conv2d_relu(x, params["conv4"])     # 256
    x = conv2d_relu(x, params["conv5"])     # 256
    x = maxpool2d(x, 3, 2)

    x = adaptive_avg_pool(x, (6, 6))        # (N, 6, 6, 256) bf16
    x = x.reshape(x.shape[0], -1)           # (N, 9216) bf16

    # classifier (Dropout = identity at inference); batch-sized tm=8, the
    # activation block stays resident in VMEM over the K reduction while
    # the 1024x2048 weight blocks stream.
    x = matmul_bias_act(x, params["fc1"], relu=True, tm_max=8, x_resident=True)
    x = matmul_bias_act(x, params["fc2"], relu=True, tm_max=8, x_resident=True)
    x = matmul_bias_act(x, params["fc3"], relu=False, tm_max=8,
                        x_resident=True, out_dtype=jnp.float32)
    return x


if __name__ == "__main__":
    # Smallest spatial size that survives the three 3x3/stride-2 max-pools is 63.
    x = jax.random.normal(jax.random.PRNGKey(0), (2, 1, 63, 63), jnp.float32)
    params = init_params(jax.random.PRNGKey(1), num_classes=6)

    out = alexnet_forward(x, params)
    out = jax.block_until_ready(out)
    assert out.shape == (2, 6), out.shape
    assert bool(jnp.all(jnp.isfinite(out)))
    print("KERNEL_OK")
</pallas_src>

<mosaic_0001>
module attributes {stable_mosaic.version = 11 : i64} {
  func.func @_gemm_kernel(%arg0: i32, %arg1: i32, %arg2: i32, %arg3: memref<128x128xbf16, #tpu.memory_space<vmem>>, %arg4: memref<128x128xbf16, #tpu.memory_space<vmem>>, %arg5: memref<1x128xf32, #tpu.memory_space<vmem>>, %arg6: memref<128x128xbf16, #tpu.memory_space<vmem>>, %arg7: memref<128x128xf32, #tpu.memory_space<vmem>>) attributes {dimension_semantics = [#tpu.dimension_semantics<parallel>, #tpu.dimension_semantics<parallel>, #tpu.dimension_semantics<arbitrary>], iteration_bounds = array<i64: 4, 1, 1>, scalar_prefetch = 0 : i64, scratch_operands = 1 : i64, tpu.core_type = #tpu.core_type<tc>, window_params = [{transform_indices = @transform_0, window_bounds = array<i64: 128, 128>}, {transform_indices = @transform_1, window_bounds = array<i64: 128, 128>}, {transform_indices = @transform_2, window_bounds = array<i64: 1, 128>}, {transform_indices = @transform_3, window_bounds = array<i64: 128, 128>}]} {
    %c0_i32 = arith.constant 0 : i32
    %0 = arith.cmpi eq, %arg2, %c0_i32 : i32
    %1 = arith.extui %0 : i1 to i32
    %c0_i32_0 = arith.constant 0 : i32
    %2 = arith.cmpi ne, %1, %c0_i32_0 : i32
    scf.if %2 {
      %cst_10 = arith.constant 0.000000e+00 : f32
      %12 = vector.broadcast %cst_10 : f32 to vector<128x128xf32>
      %c0_11 = arith.constant 0 : index
      %c0_12 = arith.constant 0 : index
      %13 = vector.load %arg7[%c0_11, %c0_12] : memref<128x128xf32, #tpu.memory_space<vmem>>, vector<128x128xf32>
      tpu.vector_store %arg7[%c0_11, %c0_12], %12 {strides = array<i32>} : memref<128x128xf32, #tpu.memory_space<vmem>>, vector<128x128xf32>,
    } else {
    }
    %c0 = arith.constant 0 : index
    %c0_1 = arith.constant 0 : index
    %3 = vector.load %arg3[%c0, %c0_1] : memref<128x128xbf16, #tpu.memory_space<vmem>>, vector<128x128xbf16>
    %c0_2 = arith.constant 0 : index
    %c0_3 = arith.constant 0 : index
    %4 = vector.load %arg7[%c0_2, %c0_3] : memref<128x128xf32, #tpu.memory_space<vmem>>, vector<128x128xf32>
    %c0_4 = arith.constant 0 : index
    %c0_5 = arith.constant 0 : index
    %5 = vector.load %arg4[%c0_4, %c0_5] : memref<128x128xbf16, #tpu.memory_space<vmem>>, vector<128x128xbf16>
    %cst = arith.constant dense<0.000000e+00> : vector<128x128xf32>
    %6 = tpu.matmul %3, %5, %cst {dimension_numbers = #tpu.dot_dimension_numbers<[1], [0], [0], [1], [0, 0, 1, 1], [], []>} : vector<128x128xbf16>, vector<128x128xbf16>, vector<128x128xf32> -> vector<128x128xf32>
    %7 = arith.addf %4, %6 : vector<128x128xf32>
    %c0_6 = arith.constant 0 : index
    %c0_7 = arith.constant 0 : index
    %8 = vector.load %arg7[%c0_6, %c0_7] : memref<128x128xf32, #tpu.memory_space<vmem>>, vector<128x128xf32>
    tpu.vector_store %arg7[%c0_6, %c0_7], %7 {strides = array<i32>} : memref<128x128xf32, #tpu.memory_space<vmem>>, vector<128x128xf32>,
    %c0_i32_8 = arith.constant 0 : i32
    %9 = arith.cmpi eq, %arg2, %c0_i32_8 : i32
    %10 = arith.extui %9 : i1 to i32
    %c0_i32_9 = arith.constant 0 : i32
    %11 = arith.cmpi ne, %10, %c0_i32_9 : i32
    scf.if %11 {
      %c0_10 = arith.constant 0 : index
      %c0_11 = arith.constant 0 : index
      %12 = vector.load %arg7[%c0_10, %c0_11] : memref<128x128xf32, #tpu.memory_space<vmem>>, vector<128x128xf32>
      %c0_12 = arith.constant 0 : index
      %c0_13 = arith.constant 0 : index
      %13 = vector.load %arg5[%c0_12, %c0_13] : memref<1x128xf32, #tpu.memory_space<vmem>>, vector<1x128xf32>
      %14 = vector.broadcast %13 : vector<1x128xf32> to vector<128x128xf32>
      %15 = arith.addf %12, %14 : vector<128x128xf32>
      %cst_14 = arith.constant 0.000000e+00 : f32
      %16 = vector.broadcast %cst_14 : f32 to vector<128x128xf32>
      %17 = arith.maximumf %15, %16 : vector<128x128xf32>
      %18 = arith.truncf %17 : vector<128x128xf32> to vector<128x128xbf16>
      %c0_15 = arith.constant 0 : index
      %c0_16 = arith.constant 0 : index
      %19 = vector.load %arg6[%c0_15, %c0_16] : memref<128x128xbf16, #tpu.memory_space<vmem>>, vector<128x128xbf16>
      tpu.vector_store %arg6[%c0_15, %c0_16], %18 {strides = array<i32>} : memref<128x128xbf16, #tpu.memory_space<vmem>>, vector<128x128xbf16>,
    } else {
    }
    return
  }
  func.func @transform_0(%arg0: i32, %arg1: i32, %arg2: i32) -> (i32, i32) {
    %c0_i32 = arith.constant 0 : i32
    return %arg0, %arg2 : i32, i32
  }
  func.func @transform_1(%arg0: i32, %arg1: i32, %arg2: i32) -> (i32, i32) {
    %c0_i32 = arith.constant 0 : i32
    return %arg2, %arg1 : i32, i32
  }
  func.func @transform_2(%arg0: i32, %arg1: i32, %arg2: i32) -> (i32, i32) {
    %c0_i32 = arith.constant 0 : i32
    %c0_i32_0 = arith.constant 0 : i32
    return %c0_i32, %arg1 : i32, i32
  }
  func.func @transform_3(%arg0: i32, %arg1: i32, %arg2: i32) -> (i32, i32) {
    %c0_i32 = arith.constant 0 : i32
    return %arg0, %arg1 : i32, i32
  }
}

</mosaic_0001>

<llo_original>
// kernel: tpu_custom_call.1
$region0: #{tpu_custom_call.1}
  #allocation0 [shape = 'u32[]', space=smem, size = 0x4, offset = 0x4, fixed_abs, tag = 'smem constant byte address 0x4 - core index']
  #allocation1 [shape = 'u32[72,128]{1,0:T(1,128)}', space=vmem, size = 0x9000, scoped, tag = 'internal scratch']
  #allocation2 [shape = 'f32[128,128]{1,0:T(8,128)}', space=vmem, size = 0x10000, scoped, tag = 'scratch operand']
  %s0 = inlined_call_operand.hbm [shape: bf16[512,128], index: 0, kind: input, shape index: {}]
  %s1 = inlined_call_operand.hbm [shape: bf16[128,128], index: 1, kind: input, shape index: {}]
  %s2 = inlined_call_operand.vmem [shape: f32[1,128], index: 2, kind: input, shape index: {}]
  %s3 = inlined_call_operand.hbm [shape: bf16[512,128], index: 3, kind: output, shape index: {}]
  %s4 = sld [smem:[#allocation0]]
  $region61: #{tpu_custom_call.1} parent=0
    _
  %s6 = ssub.s32 1, %s4
  %s7 = scalar_select 0, %s6, %s4
  $region1: #{tpu_custom_call.1} parent=0
    #allocation3 [shape = 'u8[65536]{0}', space=vmem, size = 0x10000, scoped, tag = 'input window, operand 0']
    #allocation4 [shape = 's32[2]{0}', space=sflag, size = 0x8, scoped, tag = 'scoped memory for tpu_custom_call.1']
    #allocation5 [shape = 's32[2]{0}', space=sflag, size = 0x8, scoped, tag = 'scoped memory for tpu_custom_call.1']
    #allocation6 [shape = 'u8[32768]{0}', space=vmem, size = 0x8000, scoped, tag = 'input window, operand 1, single buffered']
    #allocation7 [shape = 's32[1]{0}', space=sflag, size = 0x4, scoped, tag = 'scoped memory for tpu_custom_call.1']
    #allocation8 [shape = 'u8[65536]{0}', space=vmem, size = 0x10000, scoped, tag = 'output window, operand 0']
    %8 = vsyncpa [#allocation4], 0
    %s9 = scalar_lea.sflag [#allocation4], 1
    %10 = vsyncpa %s9, 0
    %11 = vsyncpa [#allocation7], 0
    %12 = vsyncpa [#allocation5], 0
    %s13 = scalar_lea.sflag [#allocation5], 1
    %14 = vsyncpa %s13, 0
    loop: start=0, step=1, limit=6
    $region2: #{tpu_custom_call.1} parent=1 // loop_pre_header
      _
    $region3: #{tpu_custom_call.1} parent=1 // loop_header
      %s16 = sphi 0, %s20
      %p17 = scmp.ge.s32.totalorder %s16, 6
      %s23 = sphi 0, %s42
      %s24 = sphi 0, %s38
      %s25 = sphi 0, %s34
      %s26 = sphi 0, %s23
      %s27 = sphi 0, %s24
      %s28 = sphi 0, %s25
      %s29 = sphi 0, %s26
      %s30 = sphi 0, %s27
      %s31 = sphi 0, %s28
      %s47 = sphi 0, %s49
      %s50 = sphi 0, %s47
      %s51 = sphi 0, %s50
      %s67 = sphi 0, %s51
      %s75 = sphi 0, %s77
      %s78 = sphi 0, %s75
      %s79 = sphi 0, %s78
      %s95 = sphi 0, %s79
      %s101 = sphi 0, %s103
      %s104 = sphi 0, %s101
      %s105 = sphi 0, %s104
      %s121 = sphi 0, %s105
      %s129 = sphi 0, %s131
      %s132 = sphi 0, %s129
      %s133 = sphi 0, %s132
      %s149 = sphi 0, %s133
    $region4: #{tpu_custom_call.1} parent=1 // loop_header_branch
      %19 = sbr.rel (%p17) target = $region8
    $region5: #{tpu_custom_call.1} parent=1 // loop_body
      %s21 = ssub.s32 %s16, 1
      %s22 = ssub.s32 %s16, 2
      %s32 = sadd.s32 1, %s25
      %p33 = scmp.ge.s32.totalorder %s32, 1
      %s34 = scalar_select %p33, 0, %s32
      %s35 = sadd.s32 1, %s24
      %s36 = scalar_select %p33, %s35, %s24
      %p37 = scmp.ge.s32.totalorder %s36, 1
      %s38 = scalar_select %p37, 0, %s36
      %s39 = sadd.s32 1, %s23
      %s40 = scalar_select %p37, %s39, %s23
      %p41 = scmp.ge.s32.totalorder %s40, 4
      %s42 = scalar_select %p41, 0, %s40
      %s43 = ssub.s32 %s23, %s42
      %s44 = ssub.s32 %s25, %s34
      %s45 = sor.u32 %s43, %s44
      %p46 = scmp.eq.s32.totalorder %s45, 0
      %s48 = sadd.s32 %s47, 1
      %s49 = scalar_select %p46, %s47, %s48
      %p52 = pneg %p46
      %p53 = scmp.eq.s32.totalorder %s16, 3
      %p54 = por %p52, %p53
      %p55 = scmp.ne.s32.totalorder %s47, %s50
      %p56 = scmp.eq.s32.totalorder %s16, 0
      %p57 = por %p55, %p56
      %p58 = scmp.ne.s32.totalorder %s47, %s50
      %p59 = scmp.eq.s32.totalorder %s21, 3
      %p60 = por %p58, %p59
      %p61 = scmp.ne.s32.totalorder %s50, %s51
      %p62 = scmp.eq.s32.totalorder %s21, 0
      %p63 = por %p61, %p62
      %p64 = scmp.ne.s32.totalorder %s50, %s51
      %p65 = scmp.eq.s32.totalorder %s22, 3
      %p66 = por %p64, %p65
      %p68 = scmp.ne.s32.totalorder %s51, %s67
      %p69 = scmp.eq.s32.totalorder %s22, 0
      %p70 = por %p68, %p69
      %s71 = ssub.s32 %s25, %s34
      %s72 = ssub.s32 %s24, %s38
      %s73 = sor.u32 %s71, %s72
      %p74 = scmp.eq.s32.totalorder %s73, 0
      %s76 = sadd.s32 %s75, 1
      %s77 = scalar_select %p74, %s75, %s76
      %p80 = pneg %p74
      %p81 = scmp.eq.s32.totalorder %s16, 3
      %p82 = por %p80, %p81
      %p83 = scmp.ne.s32.totalorder %s75, %s78
      %p84 = scmp.eq.s32.totalorder %s16, 0
      %p85 = por %p83, %p84
      %p86 = scmp.ne.s32.totalorder %s75, %s78
      %p87 = scmp.eq.s32.totalorder %s21, 3
      %p88 = por %p86, %p87
      %p89 = scmp.ne.s32.totalorder %s78, %s79
      %p90 = scmp.eq.s32.totalorder %s21, 0
      %p91 = por %p89, %p90
      %p92 = scmp.ne.s32.totalorder %s78, %s79
      %p93 = scmp.eq.s32.totalorder %s22, 3
      %p94 = por %p92, %p93
      %p96 = scmp.ne.s32.totalorder %s79, %s95
      %p97 = scmp.eq.s32.totalorder %s22, 0
      %p98 = por %p96, %p97
      %s99 = ssub.s32 %s24, %s38
      %p100 = scmp.eq.s32.totalorder %s99, 0
      %s102 = sadd.s32 %s101, 1
      %s103 = scalar_select %p100, %s101, %s102
      %p106 = pneg %p100
      %p107 = scmp.eq.s32.totalorder %s16, 3
      %p108 = por %p106, %p107
      %p109 = scmp.ne.s32.totalorder %s101, %s104
      %p110 = scmp.eq.s32.totalorder %s16, 0
      %p111 = por %p109, %p110
      %p112 = scmp.ne.s32.totalorder %s101, %s104
      %p113 = scmp.eq.s32.totalorder %s21, 3
      %p114 = por %p112, %p113
      %p115 = scmp.ne.s32.totalorder %s104, %s105
      %p116 = scmp.eq.s32.totalorder %s21, 0
      %p117 = por %p115, %p116
      %p118 = scmp.ne.s32.totalorder %s104, %s105
      %p119 = scmp.eq.s32.totalorder %s22, 3
      %p120 = por %p118, %p119
      %p122 = scmp.ne.s32.totalorder %s105, %s121
      %p123 = scmp.eq.s32.totalorder %s22, 0
      %p124 = por %p122, %p123
      %s125 = ssub.s32 %s23, %s42
      %s126 = ssub.s32 %s24, %s38
      %s127 = sor.u32 %s125, %s126
      %p128 = scmp.eq.s32.totalorder %s127, 0
      %s130 = sadd.s32 %s129, 1
      %s131 = scalar_select %p128, %s129, %s130
      %p134 = pneg %p128
      %p135 = scmp.eq.s32.totalorder %s16, 3
      %p136 = por %p134, %p135
      %p137 = scmp.ne.s32.totalorder %s129, %s132
      %p138 = scmp.eq.s32.totalorder %s16, 0
      %p139 = por %p137, %p138
      %p140 = scmp.ne.s32.totalorder %s129, %s132
      %p141 = scmp.eq.s32.totalorder %s21, 3
      %p142 = por %p140, %p141
      %p143 = scmp.ne.s32.totalorder %s132, %s133
      %p144 = scmp.eq.s32.totalorder %s21, 0
      %p145 = por %p143, %p144
      %p146 = scmp.ne.s32.totalorder %s132, %s133
      %p147 = scmp.eq.s32.totalorder %s22, 3
      %p148 = por %p146, %p147
      %p150 = scmp.ne.s32.totalorder %s133, %s149
      %p151 = scmp.eq.s32.totalorder %s22, 0
      %p152 = por %p150, %p151
      %p153 = scmp.le.s32.totalorder 1, %s16
      %p154 = scmp.lt.s32.totalorder %s16, 5
      %p155 = pnand %p153, %p154
      %p156 = pneg %p155
      // Predicated region
      $region9: #{tpu_custom_call.1} parent=5 // pred_check
        _
      $region10: #{tpu_custom_call.1} parent=5 // pred_check_branch
        %158 = sbr.rel (%p155) target = $region12
      $region11: #{tpu_custom_call.1} parent=5 // pred_region
        %s159 = ssub.s32 %s16, 1
        // Predicated region
        $region13: #{tpu_custom_call.1} parent=11 // pred_check
          %p160 = pneg %p91
        $region14: #{tpu_custom_call.1} parent=11 // pred_check_branch
          %162 = sbr.rel (%p160) target = $region16
        $region15: #{tpu_custom_call.1} parent=11 // pred_region
          %s163 = smul.u32 16, %s28
          %165 = vsyncadd [#allocation7], 0
          %s166 = sadd.s32 %s27, %s163
          %s167 = smul.addr %s166, 4
          %s168 = scalar_lea.hbm %s1, %s167
          %s169 = sshll.u32 %s168, 4
          %s170 = int_to_ptr.hbm [resolvable:$true] %s169
          %s171 = sshll.u32 [#allocation6], 4
          %s172 = int_to_ptr.vmem [resolvable:$true] %s171
          %177 = dma.hbm_to_vmem [thread:$0]  %s170, 1024, %s172, [#allocation7], 64, 64, 4
        $region16: #{tpu_custom_call.1} parent=11 // pred_fallthru
          _
        // Predicated region
        $region17: #{tpu_custom_call.1} parent=11 // pred_check
          %p178 = pneg %p117
        $region18: #{tpu_custom_call.1} parent=11 // pred_check_branch
          %180 = sbr.rel (%p178) target = $region20
        $region19: #{tpu_custom_call.1} parent=11 // pred_region
          %p181 = scmp.lt.s32.totalorder %s27, 0
          %s182 = scalar_select %p181, %s27, 0
          %s183 = scalar_lea.vmem %s2, %s182
        $region20: #{tpu_custom_call.1} parent=11 // pred_fallthru
          _
      $region12: #{tpu_custom_call.1} parent=5 // pred_fallthru
        _
      %p184 = scmp.lt.s32.totalorder %s16, 4
      // Predicated region
      $region21: #{tpu_custom_call.1} parent=5 // pred_check
        %p185 = pneg %p184
      $region22: #{tpu_custom_call.1} parent=5 // pred_check_branch
        %187 = sbr.rel (%p185) target = $region24
      $region23: #{tpu_custom_call.1} parent=5 // pred_region
        // Predicated region
        $region25: #{tpu_custom_call.1} parent=23 // pred_check
          %p188 = pneg %p57
        $region26: #{tpu_custom_call.1} parent=23 // pred_check_branch
          %190 = sbr.rel (%p188) target = $region28
        $region27: #{tpu_custom_call.1} parent=23 // pred_region
          %s191 = sand.u32 %s47, 1
          %s192 = scalar_lea.sflag [#allocation4], %s191
          %s193 = sand.u32 %s47, 1
          %s194 = smul.addr %s193, 64
          %s195 = scalar_lea.vmem [#allocation3], %s194
          %s196 = smul.u32 16, %s23
          %198 = vsyncadd %s192, 0
          %s199 = sadd.s32 %s25, %s196
          %s200 = smul.addr %s199, 4
          %s201 = scalar_lea.hbm %s0, %s200
          %s202 = sshll.u32 %s201, 4
          %s203 = int_to_ptr.hbm [resolvable:$true] %s202
          %s204 = sshll.u32 %s195, 4
          %s205 = int_to_ptr.vmem [resolvable:$true] %s204
          %210 = dma.hbm_to_vmem [thread:$0]  %s203, 1024, %s205, %s192, 64, 64, 4
        $region28: #{tpu_custom_call.1} parent=23 // pred_fallthru
          _
      $region24: #{tpu_custom_call.1} parent=5 // pred_fallthru
        _
      %p211 = scmp.le.s32.totalorder 1, %s16
      %p212 = scmp.lt.s32.totalorder %s16, 5
      %p213 = pnand %p211, %p212
      %p214 = pneg %p213
      // Predicated region
      $region29: #{tpu_custom_call.1} parent=5 // pred_check
        _
      $region30: #{tpu_custom_call.1} parent=5 // pred_check_branch
        %216 = sbr.rel (%p213) target = $region32
      $region31: #{tpu_custom_call.1} parent=5 // pred_region
        %s217 = ssub.s32 %s16, 1
        %s218 = sand.u32 %s50, 1
        %s219 = scalar_lea.sflag [#allocation4], %s218
        %s220 = sand.u32 %s50, 1
        %s221 = smul.addr %s220, 64
        %s222 = scalar_lea.vmem [#allocation3], %s221
        // Predicated region
        $region33: #{tpu_custom_call.1} parent=31 // pred_check
          %p223 = pneg %p63
        $region34: #{tpu_custom_call.1} parent=31 // pred_check_branch
          %225 = sbr.rel (%p223) target = $region36
        $region35: #{tpu_custom_call.1} parent=31 // pred_region
          %227 = dma.done %s219, 1024
        $region36: #{tpu_custom_call.1} parent=31 // pred_fallthru
          _
        // Predicated region
        $region37: #{tpu_custom_call.1} parent=31 // pred_check
          %p228 = pneg %p91
        $region38: #{tpu_custom_call.1} parent=31 // pred_check_branch
          %230 = sbr.rel (%p228) target = $region40
        $region39: #{tpu_custom_call.1} parent=31 // pred_region
          %232 = dma.done [#allocation7], 1024
        $region40: #{tpu_custom_call.1} parent=31 // pred_fallthru
          _
        %s233 = sand.u32 %s50, 1
        %s234 = scalar_lea.sflag [#allocation4], %s233
        %s235 = sand.u32 %s50, 1
        %s236 = smul.addr %s235, 64
        %s237 = scalar_lea.vmem [#allocation3], %s236
        %p238 = pneg %p63
        %p239 = pneg %p60
        %p240 = pneg %p91
        %p241 = pneg %p88
        %p242 = scmp.lt.s32.totalorder %s27, 0
        %s243 = scalar_select %p242, %s27, 0
        %s244 = scalar_lea.vmem %s2, %s243
        %p245 = pneg %p117
        %p246 = pneg %p114
        %p247 = pneg %p145
        %p248 = pneg %p142
        %s249 = sand.u32 %s132, 1
        %s250 = scalar_lea.sflag [#allocation5], %s249
        %s251 = sand.u32 %s132, 1
        %s252 = smul.addr %s251, 64
        %s253 = scalar_lea.vmem [#allocation8], %s252
        %s254 = smul.u32 16, %s26
        %s255 = smul.u32 16, %s28
        %p256 = scmp.lt.s32.totalorder %s27, 0
        %s257 = scalar_select %p256, %s27, 0
        %s258 = scalar_lea.vmem %s2, %s257
        %s259 = smul.u32 16, %s26
        %p260 = scmp.eq.s32.totalorder %s28, 0
        // Predicated region
        $region41: #{tpu_custom_call.1} parent=31 // pred_check
          %p261 = pneg %p260
        $region42: #{tpu_custom_call.1} parent=31 // pred_check_branch
          %263 = sbr.rel (%p261) target = $region44
        $region43: #{tpu_custom_call.1} parent=31 // pred_region
          %264 = vst [vmem:[#allocation2] sm:$0xff] 0.0
          %265 = vst [vmem:[#allocation2 + $0x8] sm:$0xff] 0.0
          %266 = vst [vmem:[#allocation2 + $0x10] sm:$0xff] 0.0
          %267 = vst [vmem:[#allocation2 + $0x18] sm:$0xff] 0.0
          %268 = vst [vmem:[#allocation2 + $0x20] sm:$0xff] 0.0
          %269 = vst [vmem:[#allocation2 + $0x28] sm:$0xff] 0.0
          %270 = vst [vmem:[#allocation2 + $0x30] sm:$0xff] 0.0
          %271 = vst [vmem:[#allocation2 + $0x38] sm:$0xff] 0.0
          %272 = vst [vmem:[#allocation2 + $0x40] sm:$0xff] 0.0
          %273 = vst [vmem:[#allocation2 + $0x48] sm:$0xff] 0.0
          %274 = vst [vmem:[#allocation2 + $0x50] sm:$0xff] 0.0
          %275 = vst [vmem:[#allocation2 + $0x58] sm:$0xff] 0.0
          %276 = vst [vmem:[#allocation2 + $0x60] sm:$0xff] 0.0
          %277 = vst [vmem:[#allocation2 + $0x68] sm:$0xff] 0.0
          %278 = vst [vmem:[#allocation2 + $0x70] sm:$0xff] 0.0
          %279 = vst [vmem:[#allocation2 + $0x78] sm:$0xff] 0.0
        $region44: #{tpu_custom_call.1} parent=31 // pred_fallthru
          _
        %v280 = vld [vmem:[%s222] sm:$0xf]
        %v281 = vld [vmem:[%s222 + $0x4] sm:$0xf]
        %v282 = vld [vmem:[%s222 + $0x8] sm:$0xf]
        %v283 = vld [vmem:[%s222 + $0xc] sm:$0xf]
        %v284 = vld [vmem:[%s222 + $0x10] sm:$0xf]
        %v285 = vld [vmem:[%s222 + $0x14] sm:$0xf]
        %v286 = vld [vmem:[%s222 + $0x18] sm:$0xf]
        %v287 = vld [vmem:[%s222 + $0x1c] sm:$0xf]
        %v288 = vld [vmem:[%s222 + $0x20] sm:$0xf]
        %v289 = vld [vmem:[%s222 + $0x24] sm:$0xf]
        %v290 = vld [vmem:[%s222 + $0x28] sm:$0xf]
        %v291 = vld [vmem:[%s222 + $0x2c] sm:$0xf]
        %v292 = vld [vmem:[%s222 + $0x30] sm:$0xf]
        %v293 = vld [vmem:[%s222 + $0x34] sm:$0xf]
        %v294 = vld [vmem:[%s222 + $0x38] sm:$0xf]
        %v295 = vld [vmem:[%s222 + $0x3c] sm:$0xf]
        %v296 = vld [vmem:[#allocation2] sm:$0xff]
        %v297 = vld [vmem:[#allocation2 + $0x8] sm:$0xff]
        %v298 = vld [vmem:[#allocation2 + $0x10] sm:$0xff]
        %v299 = vld [vmem:[#allocation2 + $0x18] sm:$0xff]
        %v300 = vld [vmem:[#allocation2 + $0x20] sm:$0xff]
        %v301 = vld [vmem:[#allocation2 + $0x28] sm:$0xff]
        %v302 = vld [vmem:[#allocation2 + $0x30] sm:$0xff]
        %v303 = vld [vmem:[#allocation2 + $0x38] sm:$0xff]
        %v304 = vld [vmem:[#allocation2 + $0x40] sm:$0xff]
        %v305 = vld [vmem:[#allocation2 + $0x48] sm:$0xff]
        %v306 = vld [vmem:[#allocation2 + $0x50] sm:$0xff]
        %v307 = vld [vmem:[#allocation2 + $0x58] sm:$0xff]
        %v308 = vld [vmem:[#allocation2 + $0x60] sm:$0xff]
        %v309 = vld [vmem:[#allocation2 + $0x68] sm:$0xff]
        %v310 = vld [vmem:[#allocation2 + $0x70] sm:$0xff]
        %v311 = vld [vmem:[#allocation2 + $0x78] sm:$0xff]
        %v312 = vld [vmem:[#allocation6] sm:$0xf]
        %v313 = vld [vmem:[#allocation6 + $0x4] sm:$0xf]
        %v314 = vld [vmem:[#allocation6 + $0x8] sm:$0xf]
        %v315 = vld [vmem:[#allocation6 + $0xc] sm:$0xf]
        %v316 = vld [vmem:[#allocation6 + $0x10] sm:$0xf]
        %v317 = vld [vmem:[#allocation6 + $0x14] sm:$0xf]
        %v318 = vld [vmem:[#allocation6 + $0x18] sm:$0xf]
        %v319 = vld [vmem:[#allocation6 + $0x1c] sm:$0xf]
        %v320 = vld [vmem:[#allocation6 + $0x20] sm:$0xf]
        %v321 = vld [vmem:[#allocation6 + $0x24] sm:$0xf]
        %v322 = vld [vmem:[#allocation6 + $0x28] sm:$0xf]
        %v323 = vld [vmem:[#allocation6 + $0x2c] sm:$0xf]
        %v324 = vld [vmem:[#allocation6 + $0x30] sm:$0xf]
        %v325 = vld [vmem:[#allocation6 + $0x34] sm:$0xf]
        %v326 = vld [vmem:[#allocation6 + $0x38] sm:$0xf]
        %v327 = vld [vmem:[#allocation6 + $0x3c] sm:$0xf]
        %v344 = vunpack.c.l.b16 %v280
        %v345 = vunpack.c.l.b16 %v281
        %v346 = vunpack.c.l.b16 %v282
        %v347 = vunpack.c.l.b16 %v283
        %v348 = vunpack.c.l.b16 %v284
        %v349 = vunpack.c.l.b16 %v285
        %v350 = vunpack.c.l.b16 %v286
        %v351 = vunpack.c.l.b16 %v287
        %v352 = vunpack.c.l.b16 %v288
        %v353 = vunpack.c.l.b16 %v289
        %v354 = vunpack.c.l.b16 %v290
        %v355 = vunpack.c.l.b16 %v291
        %v356 = vunpack.c.l.b16 %v292
        %v357 = vunpack.c.l.b16 %v293
        %v358 = vunpack.c.l.b16 %v294
        %v359 = vunpack.c.l.b16 %v295
        %v360 = vpack.c.b16 %v345, %v344
        %v361 = vpack.c.b16 %v347, %v346
        %v362 = vpack.c.b16 %v349, %v348
        %v363 = vpack.c.b16 %v351, %v350
        %v364 = vpack.c.b16 %v353, %v352
        %v365 = vpack.c.b16 %v355, %v354
        %v366 = vpack.c.b16 %v357, %v356
        %v367 = vpack.c.b16 %v359, %v358
        %v392 = vunpack.c.l.b16 %v312
        %v393 = vunpack.c.l.b16 %v313
        %v394 = vunpack.c.l.b16 %v314
        %v395 = vunpack.c.l.b16 %v315
        %v396 = vunpack.c.l.b16 %v316
        %v397 = vunpack.c.l.b16 %v317
        %v398 = vunpack.c.l.b16 %v318
        %v399 = vunpack.c.l.b16 %v319
        %v400 = vunpack.c.l.b16 %v320
        %v401 = vunpack.c.l.b16 %v321
        %v402 = vunpack.c.l.b16 %v322
        %v403 = vunpack.c.l.b16 %v323
        %v404 = vunpack.c.l.b16 %v324
        %v405 = vunpack.c.l.b16 %v325
        %v406 = vunpack.c.l.b16 %v326
        %v407 = vunpack.c.l.b16 %v327
        %v408 = vpack.c.b16 %v393, %v392
        %v409 = vpack.c.b16 %v395, %v394
        %v410 = vpack.c.b16 %v397, %v396
        %v411 = vpack.c.b16 %v399, %v398
        %v412 = vpack.c.b16 %v401, %v400
        %v413 = vpack.c.b16 %v403, %v402
        %v414 = vpack.c.b16 %v405, %v404
        %v415 = vpack.c.b16 %v407, %v406
        %424 = vmatpush.bf16.msra.mxu0 %v415
        %425 = vmatpush.bf16.msra.mxu0 %v414
        %426 = vmatpush.bf16.msra.mxu0 %v413
        %427 = vmatpush.bf16.msra.mxu0 %v412
        %428 = vmatpush.bf16.msra.mxu0 %v411
        %429 = vmatpush.bf16.msra.mxu0 %v410
        %430 = vmatpush.bf16.msra.mxu0 %v409
        %431 = vmatpush.bf16.msra.mxu0 %v408
        %432 = vmatmul.bf16.gmra.mxu0 %v360
        %v433 = vpop.f32.mrf.mxu0
        %v434 = vadd.f32 0.0, %v433
        %v435 = vpop.f32.mrf.mxu0
        %v436 = vadd.f32 0.0, %v435
        %437 = vmatmul.bf16.gmra.mxu0 %v361
        %v438 = vpop.f32.mrf.mxu0
        %v439 = vadd.f32 0.0, %v438
        %v440 = vpop.f32.mrf.mxu0
        %v441 = vadd.f32 0.0, %v440
        %442 = vmatmul.bf16.gmra.mxu0 %v362
        %v443 = vpop.f32.mrf.mxu0
        %v444 = vadd.f32 0.0, %v443
        %v445 = vpop.f32.mrf.mxu0
        %v446 = vadd.f32 0.0, %v445
        %447 = vmatmul.bf16.gmra.mxu0 %v363
        %v448 = vpop.f32.mrf.mxu0
        %v449 = vadd.f32 0.0, %v448
        %v450 = vpop.f32.mrf.mxu0
        %v451 = vadd.f32 0.0, %v450
        %452 = vmatmul.bf16.gmra.mxu0 %v364
        %v453 = vpop.f32.mrf.mxu0
        %v454 = vadd.f32 0.0, %v453
        %v455 = vpop.f32.mrf.mxu0
        %v456 = vadd.f32 0.0, %v455
        %457 = vmatmul.bf16.gmra.mxu0 %v365
        %v458 = vpop.f32.mrf.mxu0
        %v459 = vadd.f32 0.0, %v458
        %v460 = vpop.f32.mrf.mxu0
        %v461 = vadd.f32 0.0, %v460
        %462 = vmatmul.bf16.gmra.mxu0 %v366
        %v463 = vpop.f32.mrf.mxu0
        %v464 = vadd.f32 0.0, %v463
        %v465 = vpop.f32.mrf.mxu0
        %v466 = vadd.f32 0.0, %v465
        %467 = vmatmul.bf16.gmra.mxu0 %v367
        %v468 = vpop.f32.mrf.mxu0
        %v469 = vadd.f32 0.0, %v468
        %v470 = vpop.f32.mrf.mxu0
        %v471 = vadd.f32 0.0, %v470
        %472 = vdwg.mxu0
        %v473 = vadd.f32 %v296, %v434
        %v474 = vadd.f32 %v297, %v436
        %v475 = vadd.f32 %v298, %v439
        %v476 = vadd.f32 %v299, %v441
        %v477 = vadd.f32 %v300, %v444
        %v478 = vadd.f32 %v301, %v446
        %v479 = vadd.f32 %v302, %v449
        %v480 = vadd.f32 %v303, %v451
        %v481 = vadd.f32 %v304, %v454
        %v482 = vadd.f32 %v305, %v456
        %v483 = vadd.f32 %v306, %v459
        %v484 = vadd.f32 %v307, %v461
        %v485 = vadd.f32 %v308, %v464
        %v486 = vadd.f32 %v309, %v466
        %v487 = vadd.f32 %v310, %v469
        %v488 = vadd.f32 %v311, %v471
        %489 = vst [vmem:[#allocation2] sm:$0xff] %v473
        %490 = vst [vmem:[#allocation2 + $0x8] sm:$0xff] %v474
        %491 = vst [vmem:[#allocation2 + $0x10] sm:$0xff] %v475
        %492 = vst [vmem:[#allocation2 + $0x18] sm:$0xff] %v476
        %493 = vst [vmem:[#allocation2 + $0x20] sm:$0xff] %v477
        %494 = vst [vmem:[#allocation2 + $0x28] sm:$0xff] %v478
        %495 = vst [vmem:[#allocation2 + $0x30] sm:$0xff] %v479
        %496 = vst [vmem:[#allocation2 + $0x38] sm:$0xff] %v480
        %497 = vst [vmem:[#allocation2 + $0x40] sm:$0xff] %v481
        %498 = vst [vmem:[#allocation2 + $0x48] sm:$0xff] %v482
        %499 = vst [vmem:[#allocation2 + $0x50] sm:$0xff] %v483
        %500 = vst [vmem:[#allocation2 + $0x58] sm:$0xff] %v484
        %501 = vst [vmem:[#allocation2 + $0x60] sm:$0xff] %v485
        %502 = vst [vmem:[#allocation2 + $0x68] sm:$0xff] %v486
        %503 = vst [vmem:[#allocation2 + $0x70] sm:$0xff] %v487
        %504 = vst [vmem:[#allocation2 + $0x78] sm:$0xff] %v488
        // Predicated region
        $region45: #{tpu_custom_call.1} parent=31 // pred_check
          %p505 = pneg %p260
        $region46: #{tpu_custom_call.1} parent=31 // pred_check_branch
          %507 = sbr.rel (%p505) target = $region48
        $region47: #{tpu_custom_call.1} parent=31 // pred_region
          %v508 = vld [vmem:[#allocation2] sm:$0xff]
          %v509 = vld [vmem:[#allocation2 + $0x8] sm:$0xff]
          %v510 = vld [vmem:[#allocation2 + $0x10] sm:$0xff]
          %v511 = vld [vmem:[#allocation2 + $0x18] sm:$0xff]
          %v512 = vld [vmem:[#allocation2 + $0x20] sm:$0xff]
          %v513 = vld [vmem:[#allocation2 + $0x28] sm:$0xff]
          %v514 = vld [vmem:[#allocation2 + $0x30] sm:$0xff]
          %v515 = vld [vmem:[#allocation2 + $0x38] sm:$0xff]
          %v516 = vld [vmem:[#allocation2 + $0x40] sm:$0xff]
          %v517 = vld [vmem:[#allocation2 + $0x48] sm:$0xff]
          %v518 = vld [vmem:[#allocation2 + $0x50] sm:$0xff]
          %v519 = vld [vmem:[#allocation2 + $0x58] sm:$0xff]
          %v520 = vld [vmem:[#allocation2 + $0x60] sm:$0xff]
          %v521 = vld [vmem:[#allocation2 + $0x68] sm:$0xff]
          %v522 = vld [vmem:[#allocation2 + $0x70] sm:$0xff]
          %v523 = vld [vmem:[#allocation2 + $0x78] sm:$0xff]
          %v524 = vld [vmem:[%s258] sm:$0x1]
          %v526 = vperm.slane %v524, 0
          %v528 = vadd.f32 %v508, %v526
          %v529 = vadd.f32 %v509, %v526
          %v530 = vadd.f32 %v510, %v526
          %v531 = vadd.f32 %v511, %v526
          %v532 = vadd.f32 %v512, %v526
          %v533 = vadd.f32 %v513, %v526
          %v534 = vadd.f32 %v514, %v526
          %v535 = vadd.f32 %v515, %v526
          %v536 = vadd.f32 %v516, %v526
          %v537 = vadd.f32 %v517, %v526
          %v538 = vadd.f32 %v518, %v526
          %v539 = vadd.f32 %v519, %v526
          %v540 = vadd.f32 %v520, %v526
          %v541 = vadd.f32 %v521, %v526
          %v542 = vadd.f32 %v522, %v526
          %v543 = vadd.f32 %v523, %v526
          %v544 = vmax.f32 %v528, 0.0
          %v545 = vmax.f32 %v529, 0.0
          %v546 = vmax.f32 %v530, 0.0
          %v547 = vmax.f32 %v531, 0.0
          %v548 = vmax.f32 %v532, 0.0
          %v549 = vmax.f32 %v533, 0.0
          %v550 = vmax.f32 %v534, 0.0
          %v551 = vmax.f32 %v535, 0.0
          %v552 = vmax.f32 %v536, 0.0
          %v553 = vmax.f32 %v537, 0.0
          %v554 = vmax.f32 %v538, 0.0
          %v555 = vmax.f32 %v539, 0.0
          %v556 = vmax.f32 %v540, 0.0
          %v557 = vmax.f32 %v541, 0.0
          %v558 = vmax.f32 %v542, 0.0
          %v559 = vmax.f32 %v543, 0.0
          %v560 = vpack.c.bf16 %v544, %v544
          %v561 = vpack.c.bf16 %v545, %v545
          %v562 = vpack.c.bf16 %v546, %v546
          %v563 = vpack.c.bf16 %v547, %v547
          %v564 = vpack.c.bf16 %v548, %v548
          %v565 = vpack.c.bf16 %v549, %v549
          %v566 = vpack.c.bf16 %v550, %v550
          %v567 = vpack.c.bf16 %v551, %v551
          %v568 = vpack.c.bf16 %v552, %v552
          %v569 = vpack.c.bf16 %v553, %v553
          %v570 = vpack.c.bf16 %v554, %v554
          %v571 = vpack.c.bf16 %v555, %v555
          %v572 = vpack.c.bf16 %v556, %v556
          %v573 = vpack.c.bf16 %v557, %v557
          %v574 = vpack.c.bf16 %v558, %v558
          %v575 = vpack.c.bf16 %v559, %v559
          %576 = vst [vmem:[%s253] sm:$0xf] %v560
          %577 = vst [vmem:[%s253 + $0x4] sm:$0xf] %v561
          %578 = vst [vmem:[%s253 + $0x8] sm:$0xf] %v562
          %579 = vst [vmem:[%s253 + $0xc] sm:$0xf] %v563
          %580 = vst [vmem:[%s253 + $0x10] sm:$0xf] %v564
          %581 = vst [vmem:[%s253 + $0x14] sm:$0xf] %v565
          %582 = vst [vmem:[%s253 + $0x18] sm:$0xf] %v566
          %583 = vst [vmem:[%s253 + $0x1c] sm:$0xf] %v567
          %584 = vst [vmem:[%s253 + $0x20] sm:$0xf] %v568
          %585 = vst [vmem:[%s253 + $0x24] sm:$0xf] %v569
          %586 = vst [vmem:[%s253 + $0x28] sm:$0xf] %v570
          %587 = vst [vmem:[%s253 + $0x2c] sm:$0xf] %v571
          %588 = vst [vmem:[%s253 + $0x30] sm:$0xf] %v572
          %589 = vst [vmem:[%s253 + $0x34] sm:$0xf] %v573
          %590 = vst [vmem:[%s253 + $0x38] sm:$0xf] %v574
          %591 = vst [vmem:[%s253 + $0x3c] sm:$0xf] %v575
        $region48: #{tpu_custom_call.1} parent=31 // pred_fallthru
          _
        %s592 = sand.u32 %s132, 1
        %s593 = scalar_lea.sflag [#allocation5], %s592
        %s594 = sand.u32 %s132, 1
        %s595 = smul.addr %s594, 64
        %s596 = scalar_lea.vmem [#allocation8], %s595
        // Predicated region
        $region49: #{tpu_custom_call.1} parent=31 // pred_check
          %p597 = pneg %p142
        $region50: #{tpu_custom_call.1} parent=31 // pred_check_branch
          %599 = sbr.rel (%p597) target = $region52
        $region51: #{tpu_custom_call.1} parent=31 // pred_region
          %s600 = smul.u32 16, %s26
          %602 = vsyncadd %s593, 0
          %s603 = sadd.s32 %s27, %s600
          %s604 = smul.addr %s603, 4
          %s605 = scalar_lea.hbm %s3, %s604
          %s606 = sshll.u32 %s596, 4
          %s607 = int_to_ptr.vmem [resolvable:$true] %s606
          %s608 = sshll.u32 %s605, 4
          %s609 = int_to_ptr.hbm [resolvable:$true] %s608
          %614 = dma.vmem_to_hbm [thread:$0]  %s607, 1024, %s609, %s593, 64, 64, 4
        $region52: #{tpu_custom_call.1} parent=31 // pred_fallthru
          _
      $region32: #{tpu_custom_call.1} parent=5 // pred_fallthru
        _
      %p615 = scmp.le.s32.totalorder 2, %s16
      // Predicated region
      $region53: #{tpu_custom_call.1} parent=5 // pred_check
        %p616 = pneg %p615
      $region54: #{tpu_custom_call.1} parent=5 // pred_check_branch
        %618 = sbr.rel (%p616) target = $region56
      $region55: #{tpu_custom_call.1} parent=5 // pred_region
        %s619 = ssub.s32 %s16, 2
        // Predicated region
        $region57: #{tpu_custom_call.1} parent=55 // pred_check
          %p620 = pneg %p148
        $region58: #{tpu_custom_call.1} parent=55 // pred_check_branch
          %622 = sbr.rel (%p620) target = $region60
        $region59: #{tpu_custom_call.1} parent=55 // pred_region
          %s623 = sand.u32 %s133, 1
          %s624 = scalar_lea.sflag [#allocation5], %s623
          %s625 = sand.u32 %s133, 1
          %s626 = smul.addr %s625, 64
          %s627 = scalar_lea.vmem [#allocation8], %s626
          %629 = dma.done %s624, 1024
        $region60: #{tpu_custom_call.1} parent=55 // pred_fallthru
          _
      $region56: #{tpu_custom_call.1} parent=5 // pred_fallthru
        _
    $region6: #{tpu_custom_call.1} parent=1 // loop_footer
      %s20 = sadd.s32 1, %s16
    $region7: #{tpu_custom_call.1} parent=1 // loop_footer_branch
      %15 = sbr.rel target = $region3
    $region8: #{tpu_custom_call.1} parent=1 // loop_exit
      _
    %630 = vsyncpa [#allocation4], 1
    %s631 = scalar_lea.sflag [#allocation4], 1
    %632 = vsyncpa %s631, 1
    %633 = vsyncpa [#allocation7], 1
    %634 = vsyncpa [#allocation5], 1
    %s635 = scalar_lea.sflag [#allocation5], 1
    %636 = vsyncpa %s635, 1

</llo_original>
